<compile_context>
chip_gen: v5e
topology: v5e:2x2
jax: 0.10.0
libtpu: 0.0.40
codegen_flags: <defaults>
</compile_context>

<pallas_src>
import jax
import jax.numpy as jnp
from jax.experimental import pallas as pl
from jax.experimental.pallas import tpu as pltpu


def _round_up(x, m):
    return (x + m - 1) // m * m


def _linear_kernel(x_ref, w_ref, b_ref, o_ref):
    """One (TM, TN) f32 output tile, accumulated in place over the K grid axis.

    x_ref : (TM, TK) bf16 activation tile
    w_ref : (TK, TN) bf16 pre-transposed, pre-padded weight tile
    b_ref : (1,  TN) f32 bias tile
    o_ref : (TM, TN) f32 output tile -- resident across K (index_map ignores k),
            so it doubles as the accumulator (no extra VMEM scratch).
    """
    k = pl.program_id(2)

    @pl.when(k == 0)
    def _():
        o_ref[...] = jnp.zeros_like(o_ref)

    # bf16 x bf16 -> f32 on the MXU.
    o_ref[...] += jnp.dot(x_ref[...], w_ref[...],
                          preferred_element_type=jnp.float32)

    # Bias add once per output tile, in the final-K epilogue.
    @pl.when(k == pl.num_programs(2) - 1)
    def _():
        o_ref[...] += b_ref[...]


def _linear_pallas(x_bf16_padded, weight_t_padded, bias_padded, *, tm, tn, tk):
    """y = x @ w + b on pre-padded operands.  Shapes: (Mp,Kp) (Kp,Np) (1,Np)."""
    Mp, Kp = x_bf16_padded.shape
    Kp2, Np = weight_t_padded.shape
    assert Kp == Kp2, (Kp, Kp2)
    grid = (Mp // tm, Np // tn, Kp // tk)  # reduction axis (K) last

    return pl.pallas_call(
        _linear_kernel,
        out_shape=jax.ShapeDtypeStruct((Mp, Np), jnp.float32),
        grid_spec=pltpu.PrefetchScalarGridSpec(
            num_scalar_prefetch=0,
            grid=grid,
            in_specs=[
                pl.BlockSpec((tm, tk), lambda i, j, k: (i, k)),
                pl.BlockSpec((tk, tn), lambda i, j, k: (k, j)),
                pl.BlockSpec((1, tn), lambda i, j, k: (0, j)),
            ],
            out_specs=pl.BlockSpec((tm, tn), lambda i, j, k: (i, j)),
        ),
        compiler_params=pltpu.CompilerParams(
            dimension_semantics=("parallel", "parallel", "arbitrary"),
        ),
    )(x_bf16_padded, weight_t_padded, bias_padded)


class LinearMaskedJAX:
    """Mirror of pruning.modules.LinearMasked (forward pass only).

    Mask bake-in (set_masks), the one-time (K, N) weight transpose, the bf16
    cast and the tile padding of weight/bias all happen here in plain JAX at
    construction; the Pallas kernel handles the F.linear hot path.
    """
    # TODO(synk): gradient-freezing of masked params (backward hook) is a
    # training-time concern with no forward-pass Pallas equivalent; not ported.

    # Default tile targets (clamped to the problem size below).
    TM_DEFAULT = 512
    TN_DEFAULT = 512
    TK_DEFAULT = 1024

    def __init__(self, weight, bias, weight_mask, bias_mask=None):
        assert weight_mask.shape == weight.shape, "Weight Mask must match dimensions"
        self.out_features, self.in_features = weight.shape

        w = weight * weight_mask                   # set_masks: weight.data.mul_(mask)
        self.weight = w                            # (N, K), PyTorch layout, masked, f32
        self.weight_mask = weight_mask

        if bias_mask is not None:
            assert bias is not None, "Provided layer must have bias for it to be masked"
            assert bias_mask.shape == bias.shape, "Bias Mask must match dimensions"
            self.bias = bias * bias_mask           # set_masks: bias.data.mul_(mask)
            self.bias_mask = bias_mask
        else:
            self.bias = bias
            self.bias_mask = None
        if self.bias is None:
            # F.linear with bias=None is equivalent to a zero bias.
            self.bias = jnp.zeros((self.out_features,), dtype=weight.dtype)

        K, N = self.in_features, self.out_features
        # Tile sizes along K / N are fixed at construction so the weight and
        # bias can be padded once (not per forward call).
        self._TK = min(self.TK_DEFAULT, _round_up(K, 128))
        self._TN = min(self.TN_DEFAULT, _round_up(N, 128))
        self._Kp = _round_up(K, self._TK)
        self._Np = _round_up(N, self._TN)

        # One-time: mask -> transpose (K, N) -> cast bf16 -> pad to (Kp, Np).
        wt = jnp.asarray(w).T.astype(jnp.bfloat16)
        if self._Kp != K or self._Np != N:
            wt = jnp.pad(wt, ((0, self._Kp - K), (0, self._Np - N)))
        self.weight_t_padded = wt                  # (Kp, Np) bf16

        bp = jnp.asarray(self.bias, dtype=jnp.float32).reshape(1, N)
        if self._Np != N:
            bp = jnp.pad(bp, ((0, 0), (0, self._Np - N)))
        self.bias_padded = bp                      # (1, Np) f32

    def forward(self, x):
        # Support (..., in_features) inputs like F.linear.
        lead = x.shape[:-1]
        x2d = x.reshape(-1, self.in_features)
        M, K = x2d.shape

        # Per-call M tile (rounded to 16 for bf16 sublane packing).
        TM = min(self.TM_DEFAULT, _round_up(M, 16))
        Mp = _round_up(M, TM)

        xb = x2d.astype(jnp.bfloat16)
        if Mp != M or self._Kp != K:
            xb = jnp.pad(xb, ((0, Mp - M), (0, self._Kp - K)))

        out = _linear_pallas(xb, self.weight_t_padded, self.bias_padded,
                             tm=TM, tn=self._TN, tk=self._TK)

        if Mp != M or self._Np != self.out_features:
            out = out[:M, :self.out_features]
        return out.reshape(*lead, self.out_features)


if __name__ == "__main__":
    key = jax.random.PRNGKey(0)

    def ref_f32(x, w, b, wm, bm):
        bb = b * bm if bm is not None else b
        return x @ (w * wm).T + bb[None, :]

    def ref_bf16(x, w, b, wm, bm):
        # Mirrors the kernel: bf16 inputs, f32 accumulation, f32 bias add.
        xq = x.astype(jnp.bfloat16).astype(jnp.float32)
        wq = (w * wm).astype(jnp.bfloat16).astype(jnp.float32)
        bb = b * bm if bm is not None else b
        return xq @ wq.T + bb[None, :]

    # --- Test 1: shapes matching the module's typical small use ---------------
    batch, in_features, out_features = 8, 32, 32
    kx, kw, kb, kwm, kbm, key = jax.random.split(key, 6)

    x = jax.random.normal(kx, (batch, in_features), dtype=jnp.float32)
    bound = 1.0 / (in_features ** 0.5)
    weight = jax.random.uniform(kw, (out_features, in_features),
                                minval=-bound, maxval=bound, dtype=jnp.float32)
    bias = jax.random.uniform(kb, (out_features,),
                              minval=-bound, maxval=bound, dtype=jnp.float32)
    weight_mask = (jax.random.uniform(kwm, (out_features, in_features)) > 0.5
                   ).astype(jnp.float32)
    bias_mask = (jax.random.uniform(kbm, (out_features,)) > 0.5
                 ).astype(jnp.float32)

    mod = LinearMaskedJAX(weight, bias, weight_mask, bias_mask)
    y = jax.block_until_ready(mod.forward(x))

    assert jnp.allclose(y, ref_bf16(x, weight, bias, weight_mask, bias_mask),
                        atol=1e-3, rtol=1e-3)
    assert jnp.allclose(y, ref_f32(x, weight, bias, weight_mask, bias_mask),
                        atol=5e-2, rtol=5e-2)

    # --- Test 2: non-(8,128)-aligned shapes to exercise padding/slicing -------
    b2, in2, out2 = 10, 48, 72
    kx2, kw2, kb2, kwm2, kbm2, key = jax.random.split(key, 6)
    x2 = jax.random.normal(kx2, (b2, in2), dtype=jnp.float32)
    w2 = jax.random.normal(kw2, (out2, in2), dtype=jnp.float32) * 0.1
    bsc2 = jax.random.normal(kb2, (out2,), dtype=jnp.float32) * 0.1
    wm2 = (jax.random.uniform(kwm2, (out2, in2)) > 0.5).astype(jnp.float32)
    bm2 = (jax.random.uniform(kbm2, (out2,)) > 0.5).astype(jnp.float32)

    mod2 = LinearMaskedJAX(w2, bsc2, wm2, bm2)
    y2 = jax.block_until_ready(mod2.forward(x2))
    assert jnp.allclose(y2, ref_bf16(x2, w2, bsc2, wm2, bm2), atol=1e-3, rtol=1e-3)
    assert jnp.allclose(y2, ref_f32(x2, w2, bsc2, wm2, bm2), atol=5e-2, rtol=5e-2)

    # --- Test 3: leading batch dims, no bias mask ------------------------------
    kx3, key = jax.random.split(key, 2)
    x3 = jax.random.normal(kx3, (2, 4, in_features), dtype=jnp.float32)
    mod3 = LinearMaskedJAX(weight, bias, weight_mask, None)
    y3 = jax.block_until_ready(mod3.forward(x3))
    y3_ref = ref_bf16(x3.reshape(-1, in_features), weight, bias, weight_mask,
                      jnp.ones_like(bias)).reshape(2, 4, out_features)
    assert jnp.allclose(y3, y3_ref, atol=1e-3, rtol=1e-3)

    print("KERNEL_OK")
</pallas_src>

<mosaic_0001>
module attributes {stable_mosaic.version = 11 : i64} {
  func.func @_linear_kernel(%arg0: i32, %arg1: i32, %arg2: i32, %arg3: memref<16x128xbf16, #tpu.memory_space<vmem>>, %arg4: memref<128x128xbf16, #tpu.memory_space<vmem>>, %arg5: memref<1x128xf32, #tpu.memory_space<vmem>>, %arg6: memref<16x128xf32, #tpu.memory_space<vmem>>) attributes {dimension_semantics = [#tpu.dimension_semantics<parallel>, #tpu.dimension_semantics<parallel>, #tpu.dimension_semantics<arbitrary>], iteration_bounds = array<i64: 1, 1, 1>, scalar_prefetch = 0 : i64, scratch_operands = 0 : i64, tpu.core_type = #tpu.core_type<tc>, window_params = [{transform_indices = @transform_0, window_bounds = array<i64: 16, 128>}, {transform_indices = @transform_1, window_bounds = array<i64: 128, 128>}, {transform_indices = @transform_2, window_bounds = array<i64: 1, 128>}, {transform_indices = @transform_3, window_bounds = array<i64: 16, 128>}]} {
    %c0_i32 = arith.constant 0 : i32
    %0 = arith.cmpi eq, %arg2, %c0_i32 : i32
    %1 = arith.extui %0 : i1 to i32
    %c0_i32_0 = arith.constant 0 : i32
    %2 = arith.cmpi ne, %1, %c0_i32_0 : i32
    scf.if %2 {
      %cst_10 = arith.constant 0.000000e+00 : f32
      %12 = vector.broadcast %cst_10 : f32 to vector<16x128xf32>
      %c0_11 = arith.constant 0 : index
      %c0_12 = arith.constant 0 : index
      %13 = vector.load %arg6[%c0_11, %c0_12] : memref<16x128xf32, #tpu.memory_space<vmem>>, vector<16x128xf32>
      tpu.vector_store %arg6[%c0_11, %c0_12], %12 {strides = array<i32>} : memref<16x128xf32, #tpu.memory_space<vmem>>, vector<16x128xf32>,
    } else {
    }
    %c0 = arith.constant 0 : index
    %c0_1 = arith.constant 0 : index
    %3 = vector.load %arg6[%c0, %c0_1] : memref<16x128xf32, #tpu.memory_space<vmem>>, vector<16x128xf32>
    %c0_2 = arith.constant 0 : index
    %c0_3 = arith.constant 0 : index
    %4 = vector.load %arg3[%c0_2, %c0_3] : memref<16x128xbf16, #tpu.memory_space<vmem>>, vector<16x128xbf16>
    %c0_4 = arith.constant 0 : index
    %c0_5 = arith.constant 0 : index
    %5 = vector.load %arg4[%c0_4, %c0_5] : memref<128x128xbf16, #tpu.memory_space<vmem>>, vector<128x128xbf16>
    %cst = arith.constant dense<0.000000e+00> : vector<16x128xf32>
    %6 = tpu.matmul %4, %5, %cst {dimension_numbers = #tpu.dot_dimension_numbers<[1], [0], [0], [1], [0, 0, 1, 1], [], []>} : vector<16x128xbf16>, vector<128x128xbf16>, vector<16x128xf32> -> vector<16x128xf32>
    %7 = arith.addf %3, %6 : vector<16x128xf32>
    %c0_6 = arith.constant 0 : index
    %c0_7 = arith.constant 0 : index
    %8 = vector.load %arg6[%c0_6, %c0_7] : memref<16x128xf32, #tpu.memory_space<vmem>>, vector<16x128xf32>
    tpu.vector_store %arg6[%c0_6, %c0_7], %7 {strides = array<i32>} : memref<16x128xf32, #tpu.memory_space<vmem>>, vector<16x128xf32>,
    %c0_i32_8 = arith.constant 0 : i32
    %9 = arith.cmpi eq, %arg2, %c0_i32_8 : i32
    %10 = arith.extui %9 : i1 to i32
    %c0_i32_9 = arith.constant 0 : i32
    %11 = arith.cmpi ne, %10, %c0_i32_9 : i32
    scf.if %11 {
      %c0_10 = arith.constant 0 : index
      %c0_11 = arith.constant 0 : index
      %12 = vector.load %arg6[%c0_10, %c0_11] : memref<16x128xf32, #tpu.memory_space<vmem>>, vector<16x128xf32>
      %c0_12 = arith.constant 0 : index
      %c0_13 = arith.constant 0 : index
      %13 = vector.load %arg5[%c0_12, %c0_13] : memref<1x128xf32, #tpu.memory_space<vmem>>, vector<1x128xf32>
      %14 = vector.broadcast %13 : vector<1x128xf32> to vector<16x128xf32>
      %15 = arith.addf %12, %14 : vector<16x128xf32>
      %c0_14 = arith.constant 0 : index
      %c0_15 = arith.constant 0 : index
      %16 = vector.load %arg6[%c0_14, %c0_15] : memref<16x128xf32, #tpu.memory_space<vmem>>, vector<16x128xf32>
      tpu.vector_store %arg6[%c0_14, %c0_15], %15 {strides = array<i32>} : memref<16x128xf32, #tpu.memory_space<vmem>>, vector<16x128xf32>,
    } else {
    }
    return
  }
  func.func @transform_0(%arg0: i32, %arg1: i32, %arg2: i32) -> (i32, i32) {
    %c0_i32 = arith.constant 0 : i32
    return %arg0, %arg2 : i32, i32
  }
  func.func @transform_1(%arg0: i32, %arg1: i32, %arg2: i32) -> (i32, i32) {
    %c0_i32 = arith.constant 0 : i32
    return %arg2, %arg1 : i32, i32
  }
  func.func @transform_2(%arg0: i32, %arg1: i32, %arg2: i32) -> (i32, i32) {
    %c0_i32 = arith.constant 0 : i32
    %c0_i32_0 = arith.constant 0 : i32
    return %c0_i32, %arg1 : i32, i32
  }
  func.func @transform_3(%arg0: i32, %arg1: i32, %arg2: i32) -> (i32, i32) {
    %c0_i32 = arith.constant 0 : i32
    return %arg0, %arg1 : i32, i32
  }
}

</mosaic_0001>

<llo_original>
// kernel: tpu_custom_call.1
$region0: #{tpu_custom_call.1}
  #allocation0 [shape = 'u32[]', space=smem, size = 0x4, offset = 0x4, fixed_abs, tag = 'smem constant byte address 0x4 - core index']
  #allocation1 [shape = 'u32[72,128]{1,0:T(1,128)}', space=vmem, size = 0x9000, scoped, tag = 'internal scratch']
  %s0 = inlined_call_operand.hbm [shape: bf16[16,128], index: 0, kind: input, shape index: {}]
  %s1 = inlined_call_operand.hbm [shape: bf16[128,128], index: 1, kind: input, shape index: {}]
  %s2 = inlined_call_operand.vmem [shape: f32[1,128], index: 2, kind: input, shape index: {}]
  %s3 = inlined_call_operand.hbm [shape: f32[16,128], index: 3, kind: output, shape index: {}]
  %s4 = sld [smem:[#allocation0]]
  $region38: #{tpu_custom_call.1} parent=0
    _
  %s6 = ssub.s32 1, %s4
  %s7 = scalar_select 0, %s6, %s4
  $region1: #{tpu_custom_call.1} parent=0
    #allocation2 [shape = 'u8[4096]{0}', space=vmem, size = 0x1000, scoped, tag = 'input window, operand 0, single buffered']
    #allocation3 [shape = 's32[1]{0}', space=sflag, size = 0x4, scoped, tag = 'scoped memory for tpu_custom_call.1']
    #allocation4 [shape = 's32[1]{0}', space=sflag, size = 0x4, scoped, tag = 'scoped memory for tpu_custom_call.1']
    #allocation5 [shape = 'u8[32768]{0}', space=vmem, size = 0x8000, scoped, tag = 'input window, operand 1, single buffered']
    #allocation6 [shape = 's32[1]{0}', space=sflag, size = 0x4, scoped, tag = 'scoped memory for tpu_custom_call.1']
    #allocation7 [shape = 'u8[8192]{0}', space=vmem, size = 0x2000, scoped, tag = 'output window, operand 0, single buffered']
    %8 = vsyncpa [#allocation3], 0
    %9 = vsyncpa [#allocation6], 0
    %10 = vsyncpa [#allocation4], 0
    // Predicated region
    $region2: #{tpu_custom_call.1} parent=1 // pred_check
      _
    $region3: #{tpu_custom_call.1} parent=1 // pred_check_branch
      %12 = sbr.rel (0) target = $region5
    $region4: #{tpu_custom_call.1} parent=1 // pred_region
      %14 = vsyncadd [#allocation3], 0
      %s15 = sshll.u32 %s0, 4
      %s16 = int_to_ptr.hbm [resolvable:$true] %s15
      %s17 = sshll.u32 [#allocation2], 4
      %s18 = int_to_ptr.vmem [resolvable:$true] %s17
      %23 = dma.hbm_to_vmem [thread:$0]  %s16, 128, %s18, [#allocation3], 64, 64, 4
    $region5: #{tpu_custom_call.1} parent=1 // pred_fallthru
      _
    // Predicated region
    $region6: #{tpu_custom_call.1} parent=1 // pred_check
      _
    $region7: #{tpu_custom_call.1} parent=1 // pred_check_branch
      %25 = sbr.rel (0) target = $region9
    $region8: #{tpu_custom_call.1} parent=1 // pred_region
      %27 = vsyncadd [#allocation6], 0
      %s28 = sshll.u32 %s1, 4
      %s29 = int_to_ptr.hbm [resolvable:$true] %s28
      %s30 = sshll.u32 [#allocation5], 4
      %s31 = int_to_ptr.vmem [resolvable:$true] %s30
      %36 = dma.hbm_to_vmem [thread:$0]  %s29, 1024, %s31, [#allocation6], 64, 64, 4
    $region9: #{tpu_custom_call.1} parent=1 // pred_fallthru
      _
    // Predicated region
    $region10: #{tpu_custom_call.1} parent=1 // pred_check
      _
    $region11: #{tpu_custom_call.1} parent=1 // pred_check_branch
      %38 = sbr.rel (0) target = $region13
    $region12: #{tpu_custom_call.1} parent=1 // pred_region
      _
    $region13: #{tpu_custom_call.1} parent=1 // pred_fallthru
      _
    // Predicated region
    $region14: #{tpu_custom_call.1} parent=1 // pred_check
      _
    $region15: #{tpu_custom_call.1} parent=1 // pred_check_branch
      %40 = sbr.rel (0) target = $region17
    $region16: #{tpu_custom_call.1} parent=1 // pred_region
      %42 = dma.done [#allocation3], 128
    $region17: #{tpu_custom_call.1} parent=1 // pred_fallthru
      _
    // Predicated region
    $region18: #{tpu_custom_call.1} parent=1 // pred_check
      _
    $region19: #{tpu_custom_call.1} parent=1 // pred_check_branch
      %44 = sbr.rel (0) target = $region21
    $region20: #{tpu_custom_call.1} parent=1 // pred_region
      %46 = dma.done [#allocation6], 1024
    $region21: #{tpu_custom_call.1} parent=1 // pred_fallthru
      _
    %p47 = scmp.eq.s32.totalorder 0, 0
    // Predicated region
    $region22: #{tpu_custom_call.1} parent=1 // pred_check
      %p48 = pneg %p47
    $region23: #{tpu_custom_call.1} parent=1 // pred_check_branch
      %50 = sbr.rel (%p48) target = $region25
    $region24: #{tpu_custom_call.1} parent=1 // pred_region
      %51 = vst [vmem:[#allocation7] sm:$0xff] 0.0
      %52 = vst [vmem:[#allocation7 + $0x8] sm:$0xff] 0.0
    $region25: #{tpu_custom_call.1} parent=1 // pred_fallthru
      _
    %v53 = vld [vmem:[#allocation7] sm:$0xff]
    %v54 = vld [vmem:[#allocation7 + $0x8] sm:$0xff]
    %v55 = vld [vmem:[#allocation2] sm:$0xf]
    %v56 = vld [vmem:[#allocation2 + $0x4] sm:$0xf]
    %v57 = vld [vmem:[#allocation5] sm:$0xf]
    %v58 = vld [vmem:[#allocation5 + $0x4] sm:$0xf]
    %v59 = vld [vmem:[#allocation5 + $0x8] sm:$0xf]
    %v60 = vld [vmem:[#allocation5 + $0xc] sm:$0xf]
    %v61 = vld [vmem:[#allocation5 + $0x10] sm:$0xf]
    %v62 = vld [vmem:[#allocation5 + $0x14] sm:$0xf]
    %v63 = vld [vmem:[#allocation5 + $0x18] sm:$0xf]
    %v64 = vld [vmem:[#allocation5 + $0x1c] sm:$0xf]
    %v65 = vld [vmem:[#allocation5 + $0x20] sm:$0xf]
    %v66 = vld [vmem:[#allocation5 + $0x24] sm:$0xf]
    %v67 = vld [vmem:[#allocation5 + $0x28] sm:$0xf]
    %v68 = vld [vmem:[#allocation5 + $0x2c] sm:$0xf]
    %v69 = vld [vmem:[#allocation5 + $0x30] sm:$0xf]
    %v70 = vld [vmem:[#allocation5 + $0x34] sm:$0xf]
    %v71 = vld [vmem:[#allocation5 + $0x38] sm:$0xf]
    %v72 = vld [vmem:[#allocation5 + $0x3c] sm:$0xf]
    %v75 = vunpack.c.l.b16 %v55
    %v76 = vunpack.c.l.b16 %v56
    %v77 = vpack.c.b16 %v76, %v75
    %v95 = vunpack.c.l.b16 %v57
    %v96 = vunpack.c.l.b16 %v58
    %v97 = vunpack.c.l.b16 %v59
    %v98 = vunpack.c.l.b16 %v60
    %v99 = vunpack.c.l.b16 %v61
    %v100 = vunpack.c.l.b16 %v62
    %v101 = vunpack.c.l.b16 %v63
    %v102 = vunpack.c.l.b16 %v64
    %v103 = vunpack.c.l.b16 %v65
    %v104 = vunpack.c.l.b16 %v66
    %v105 = vunpack.c.l.b16 %v67
    %v106 = vunpack.c.l.b16 %v68
    %v107 = vunpack.c.l.b16 %v69
    %v108 = vunpack.c.l.b16 %v70
    %v109 = vunpack.c.l.b16 %v71
    %v110 = vunpack.c.l.b16 %v72
    %v111 = vpack.c.b16 %v96, %v95
    %v112 = vpack.c.b16 %v98, %v97
    %v113 = vpack.c.b16 %v100, %v99
    %v114 = vpack.c.b16 %v102, %v101
    %v115 = vpack.c.b16 %v104, %v103
    %v116 = vpack.c.b16 %v106, %v105
    %v117 = vpack.c.b16 %v108, %v107
    %v118 = vpack.c.b16 %v110, %v109
    %127 = vmatpush.bf16.msra.mxu0 %v118
    %128 = vmatpush.bf16.msra.mxu0 %v117
    %129 = vmatpush.bf16.msra.mxu0 %v116
    %130 = vmatpush.bf16.msra.mxu0 %v115
    %131 = vmatpush.bf16.msra.mxu0 %v114
    %132 = vmatpush.bf16.msra.mxu0 %v113
    %133 = vmatpush.bf16.msra.mxu0 %v112
    %134 = vmatpush.bf16.msra.mxu0 %v111
    %135 = vmatmul.bf16.gmra.mxu0 %v77
    %v136 = vpop.f32.mrf.mxu0
    %v137 = vadd.f32 0.0, %v136
    %v138 = vpop.f32.mrf.mxu0
    %v139 = vadd.f32 0.0, %v138
    %140 = vdwg.mxu0
    %v141 = vadd.f32 %v53, %v137
    %v142 = vadd.f32 %v54, %v139
    %143 = vst [vmem:[#allocation7] sm:$0xff] %v141
    %144 = vst [vmem:[#allocation7 + $0x8] sm:$0xff] %v142
    // Predicated region
    $region26: #{tpu_custom_call.1} parent=1 // pred_check
      %p145 = pneg %p47
    $region27: #{tpu_custom_call.1} parent=1 // pred_check_branch
      %147 = sbr.rel (%p145) target = $region29
    $region28: #{tpu_custom_call.1} parent=1 // pred_region
      %v148 = vld [vmem:[#allocation7] sm:$0xff]
      %v149 = vld [vmem:[#allocation7 + $0x8] sm:$0xff]
      %v150 = vld [vmem:[%s2] sm:$0x1]
      %v152 = vperm.slane %v150, 0
      %v154 = vadd.f32 %v148, %v152
      %v155 = vadd.f32 %v149, %v152
      %156 = vst [vmem:[#allocation7] sm:$0xff] %v154
      %157 = vst [vmem:[#allocation7 + $0x8] sm:$0xff] %v155
    $region29: #{tpu_custom_call.1} parent=1 // pred_fallthru
      _
    // Predicated region
    $region30: #{tpu_custom_call.1} parent=1 // pred_check
      _
    $region31: #{tpu_custom_call.1} parent=1 // pred_check_branch
      %159 = sbr.rel (0) target = $region33
    $region32: #{tpu_custom_call.1} parent=1 // pred_region
      %161 = vsyncadd [#allocation4], 0
      %s162 = sshll.u32 [#allocation7], 4
      %s163 = int_to_ptr.vmem [resolvable:$true] %s162
      %s164 = sshll.u32 %s3, 4
      %s165 = int_to_ptr.hbm [resolvable:$true] %s164
      %170 = dma.vmem_to_hbm [thread:$0]  %s163, 256, %s165, [#allocation4], 128, 128, 8
    $region33: #{tpu_custom_call.1} parent=1 // pred_fallthru
      _
    // Predicated region
    $region34: #{tpu_custom_call.1} parent=1 // pred_check
      _
    $region35: #{tpu_custom_call.1} parent=1 // pred_check_branch
      %172 = sbr.rel (0) target = $region37
    $region36: #{tpu_custom_call.1} parent=1 // pred_region
      %174 = dma.done [#allocation4], 256
    $region37: #{tpu_custom_call.1} parent=1 // pred_fallthru
      _
    %175 = vsyncpa [#allocation3], 1
    %176 = vsyncpa [#allocation6], 1
    %177 = vsyncpa [#allocation4], 1

</llo_original>
